<compile_context>
chip_gen: v6e
topology: v6e:2x2x1
jax: 0.10.0
libtpu: 0.0.40
codegen_flags: <defaults>
</compile_context>

<pallas_src>
import functools

import jax
import jax.numpy as jnp
from jax.experimental import pallas as pl
from jax.experimental.pallas import tpu as pltpu


def _pick_row_tile(h_out, w_out, kpad, *, itemsize=2, max_lanes=2048,
                   scratch_budget=4 << 20):
    """Output rows per grid step.  Prefer th dividing h_out with th*w_out a multiple
    of 128 (unmasked lane-dense stores, big MXU N) under a VMEM scratch budget;
    fall back to th = h_out (full-extent block, always legal)."""
    cands = [th for th in range(1, h_out + 1)
             if h_out % th == 0 and (th * w_out) % 128 == 0]
    fitting = [th for th in cands
               if th * w_out <= max_lanes
               and th * w_out * kpad * itemsize <= scratch_budget]
    if fitting:
        return max(fitting)
    if cands:
        return min(cands)
    return h_out


def conv_block_forward(x, weight, bias, *, stride=2, compute_dtype=jnp.bfloat16):
    """
    x:      (N, C_in, H, W)           float32, NCHW (PyTorch layout)
    weight: (C_out, C_in, K, K)       float32
    bias:   (C_out,)                  float32
    returns (N, C_out, H_out, W_out)  float32, NCHW
    """
    N, C_in, H, W = x.shape
    C_out, _, K, _ = weight.shape
    pad = (K - 1) // 2
    s = stride
    H_out = (H + 2 * pad - K) // s + 1
    W_out = (W + 2 * pad - K) // s + 1

    Cin8 = ((C_in + 7) // 8) * 8          # per-tap sublane alignment
    Kpad = K * K * Cin8                   # contraction depth (multiple of 8)
    dh_max = (K - 1) // s                 # row halo (in plane rows)

    th = _pick_row_tile(H_out, W_out, Kpad)
    n_row_tiles = H_out // th
    L = th * W_out                        # lanes of the per-step GEMM / output block
    L_ext = (th + dh_max) * W_out         # tile + halo window in a flattened plane
    Hp = H_out + dh_max                   # plane rows (incl. halo)

    # ---- single layout pass (O(|x|), no K*K im2col blow-up in HBM) ------------
    rows_needed = s * (Hp - 1) + (s - 1) + 1
    cols_needed = s * (W_out - 1) + (K - 1) + 1
    pad_b = max(rows_needed - (H + pad), 0)
    pad_r = max(cols_needed - (W + pad), 0)
    xp = jnp.pad(x, ((0, 0), (0, Cin8 - C_in), (pad, pad_b), (pad, pad_r))
                 ).astype(compute_dtype)

    # One plane per (row-phase pr, column tap kw):
    #   P[n, c, i, j] = xp[n, c, s*i + pr, s*j + kw]
    # flattened over (i, j) and pre-windowed per row tile (halo duplicated) so every
    # in-kernel tap read is a contiguous, static, full-width slice.
    planes = []
    for pr in range(s):
        for kw in range(K):
            p4 = xp[:, :, pr:pr + s * (Hp - 1) + 1:s,
                          kw:kw + s * (W_out - 1) + 1:s]        # (N, Cin8, Hp, W_out)
            pf = p4.reshape(N, Cin8, Hp * W_out)
            wins = jnp.stack([pf[:, :, i * L:i * L + L_ext]
                              for i in range(n_row_tiles)], axis=1)
            planes.append(wins)                                  # (N, nrt, Cin8, L_ext)
    n_planes = len(planes)                                       # = s * K

    # Weights as one (C_out, Kpad) matrix, contraction order (kh, kw, ci) with the
    # channel block zero-padded to Cin8 to match the patch layout.
    wt = jnp.transpose(weight, (0, 2, 3, 1))                     # (C_out, K, K, C_in)
    wt = jnp.pad(wt, ((0, 0), (0, 0), (0, 0), (0, Cin8 - C_in)))
    w2 = wt.reshape(C_out, Kpad).astype(compute_dtype)
    b2 = bias.reshape(C_out, 1).astype(jnp.float32)

    def kernel(*refs):
        plane_refs = refs[:n_planes]
        w_ref, b_ref, o_ref, p_ref = refs[n_planes:]

        # In-VMEM im2col: K*K dense, sublane-aligned, full-lane-width copies.
        for kh in range(K):
            pr, dh = kh % s, kh // s
            for kw in range(K):
                tap = kh * K + kw
                src = plane_refs[pr * K + kw]                    # (Cin8, L_ext)
                p_ref[pl.ds(tap * Cin8, Cin8), :] = src[:, pl.ds(dh * W_out, L)]

        # One batched MXU GEMM per grid step: bf16 in, f32 accumulation.
        acc = jnp.dot(w_ref[...], p_ref[...],
                      preferred_element_type=jnp.float32)        # (C_out, L)
        acc = acc + b_ref[...]                                   # bias (f32)
        acc = jnp.where(acc > 0, acc, 0.1 * acc)                 # LeakyReLU(0.1)
        o_ref[...] = acc.astype(o_ref.dtype)                     # lane-dense store

    in_specs = [pl.BlockSpec((pl.Squeezed(), pl.Squeezed(), Cin8, L_ext),
                             lambda n, i: (n, i, 0, 0))
                for _ in range(n_planes)]
    in_specs.append(pl.BlockSpec((C_out, Kpad), lambda n, i: (0, 0)))   # weights
    in_specs.append(pl.BlockSpec((C_out, 1), lambda n, i: (0, 0)))      # bias

    out_spec = pl.BlockSpec((pl.Squeezed(), C_out, L), lambda n, i: (n, 0, i))

    # Explicit VMEM budget (double-buffered plane/weight/output blocks + scratch).
    est = (n_planes * Cin8 * L_ext * 2 * 2
           + C_out * Kpad * 2 * 2
           + C_out * 4 * 2
           + Kpad * L * 2
           + C_out * L * 4 * 2)
    vmem_limit = int(min(max(4 * est, 16 << 20), 64 << 20))

    out_flat = pl.pallas_call(
        kernel,
        out_shape=jax.ShapeDtypeStruct((N, C_out, H_out * W_out), x.dtype),
        grid_spec=pltpu.PrefetchScalarGridSpec(
            num_scalar_prefetch=0,
            grid=(N, n_row_tiles),           # N outermost -> megacore shards on images
            in_specs=in_specs,
            out_specs=out_spec,
            scratch_shapes=[pltpu.VMEM((Kpad, L), compute_dtype)],
        ),
        compiler_params=pltpu.CompilerParams(
            dimension_semantics=("parallel", "parallel"),
            vmem_limit_bytes=vmem_limit),
    )(*planes, w2, b2)

    return out_flat.reshape(N, C_out, H_out, W_out)   # free (row-major contiguous)


if __name__ == "__main__":
    key = jax.random.PRNGKey(0)
    k_x, k_w, k_b = jax.random.split(key, 3)

    # small shapes consistent with the module
    N, C_in, H, W = 2, 4, 16, 16
    C_out, K, stride = 8, 5, 2

    x = jax.random.normal(k_x, (N, C_in, H, W), dtype=jnp.float32)
    fan_in = C_in * K * K
    weight = jax.random.normal(k_w, (C_out, C_in, K, K), dtype=jnp.float32) / jnp.sqrt(fan_in)
    bias = jax.random.normal(k_b, (C_out,), dtype=jnp.float32) * 0.1

    fwd = jax.jit(functools.partial(conv_block_forward, stride=stride))
    out = jax.block_until_ready(fwd(x, weight, bias))

    # reference: XLA conv (f32 params) + bias + LeakyReLU
    ref = jax.lax.conv_general_dilated(
        x, weight,
        window_strides=(stride, stride),
        padding=[((K - 1) // 2, (K - 1) // 2)] * 2,
        dimension_numbers=("NCHW", "OIHW", "NCHW"),
    ) + bias.reshape(1, C_out, 1, 1)
    ref = jnp.where(ref > 0, ref, 0.1 * ref)

    assert out.shape == ref.shape == (N, C_out, H // stride, W // stride)
    # bf16 matmul inputs (f32 accumulation/epilogue) -> loosened tolerance
    err = float(jnp.max(jnp.abs(out - ref)))
    assert jnp.allclose(out, ref, atol=5e-2, rtol=5e-2), err

    print("KERNEL_OK")
</pallas_src>

<mosaic_0001>
module attributes {stable_mosaic.version = 11 : i64} {
  func.func @kernel(%arg0: i32, %arg1: i32, %arg2: memref<1x1x8x80xbf16, #tpu.memory_space<vmem>>, %arg3: memref<1x1x8x80xbf16, #tpu.memory_space<vmem>>, %arg4: memref<1x1x8x80xbf16, #tpu.memory_space<vmem>>, %arg5: memref<1x1x8x80xbf16, #tpu.memory_space<vmem>>, %arg6: memref<1x1x8x80xbf16, #tpu.memory_space<vmem>>, %arg7: memref<1x1x8x80xbf16, #tpu.memory_space<vmem>>, %arg8: memref<1x1x8x80xbf16, #tpu.memory_space<vmem>>, %arg9: memref<1x1x8x80xbf16, #tpu.memory_space<vmem>>, %arg10: memref<1x1x8x80xbf16, #tpu.memory_space<vmem>>, %arg11: memref<1x1x8x80xbf16, #tpu.memory_space<vmem>>, %arg12: memref<8x200xbf16, #tpu.memory_space<vmem>>, %arg13: memref<8x1xf32, #tpu.memory_space<vmem>>, %arg14: memref<1x8x64xf32, #tpu.memory_space<vmem>>, %arg15: memref<200x64xbf16, #tpu.memory_space<vmem>>) attributes {dimension_semantics = [#tpu.dimension_semantics<parallel>, #tpu.dimension_semantics<parallel>], iteration_bounds = array<i64: 2, 1>, scalar_prefetch = 0 : i64, scratch_operands = 1 : i64, tpu.core_type = #tpu.core_type<tc>, window_params = [{transform_indices = @transform_0, window_bounds = array<i64: 1, 1, 8, 80>}, {transform_indices = @transform_1, window_bounds = array<i64: 1, 1, 8, 80>}, {transform_indices = @transform_2, window_bounds = array<i64: 1, 1, 8, 80>}, {transform_indices = @transform_3, window_bounds = array<i64: 1, 1, 8, 80>}, {transform_indices = @transform_4, window_bounds = array<i64: 1, 1, 8, 80>}, {transform_indices = @transform_5, window_bounds = array<i64: 1, 1, 8, 80>}, {transform_indices = @transform_6, window_bounds = array<i64: 1, 1, 8, 80>}, {transform_indices = @transform_7, window_bounds = array<i64: 1, 1, 8, 80>}, {transform_indices = @transform_8, window_bounds = array<i64: 1, 1, 8, 80>}, {transform_indices = @transform_9, window_bounds = array<i64: 1, 1, 8, 80>}, {pipeline_mode = #tpu.pipeline_mode<synchronous>, transform_indices = @transform_10, window_bounds = array<i64: 8, 200>}, {pipeline_mode = #tpu.pipeline_mode<synchronous>, transform_indices = @transform_11, window_bounds = array<i64: 8, 1>}, {transform_indices = @transform_12, window_bounds = array<i64: 1, 8, 64>}]} {
    %c0 = arith.constant 0 : index
    %c0_0 = arith.constant 0 : index
    %c0_1 = arith.constant 0 : index
    %c0_2 = arith.constant 0 : index
    %0 = vector.load %arg2[%c0, %c0_0, %c0_1, %c0_2] : memref<1x1x8x80xbf16, #tpu.memory_space<vmem>>, vector<1x1x8x64xbf16>
    %1 = vector.shape_cast %0 : vector<1x1x8x64xbf16> to vector<8x64xbf16>
    %c0_3 = arith.constant 0 : index
    %c0_4 = arith.constant 0 : index
    %2 = vector.load %arg15[%c0_3, %c0_4] : memref<200x64xbf16, #tpu.memory_space<vmem>>, vector<8x64xbf16>
    tpu.vector_store %arg15[%c0_3, %c0_4], %1 {strides = array<i32>} : memref<200x64xbf16, #tpu.memory_space<vmem>>, vector<8x64xbf16>,
    %c0_5 = arith.constant 0 : index
    %c0_6 = arith.constant 0 : index
    %c0_7 = arith.constant 0 : index
    %c0_8 = arith.constant 0 : index
    %3 = vector.load %arg3[%c0_5, %c0_6, %c0_7, %c0_8] : memref<1x1x8x80xbf16, #tpu.memory_space<vmem>>, vector<1x1x8x64xbf16>
    %4 = vector.shape_cast %3 : vector<1x1x8x64xbf16> to vector<8x64xbf16>
    %c8 = arith.constant 8 : index
    %c0_9 = arith.constant 0 : index
    %5 = vector.load %arg15[%c8, %c0_9] : memref<200x64xbf16, #tpu.memory_space<vmem>>, vector<8x64xbf16>
    tpu.vector_store %arg15[%c8, %c0_9], %4 {strides = array<i32>} : memref<200x64xbf16, #tpu.memory_space<vmem>>, vector<8x64xbf16>,
    %c0_10 = arith.constant 0 : index
    %c0_11 = arith.constant 0 : index
    %c0_12 = arith.constant 0 : index
    %c0_13 = arith.constant 0 : index
    %6 = vector.load %arg4[%c0_10, %c0_11, %c0_12, %c0_13] : memref<1x1x8x80xbf16, #tpu.memory_space<vmem>>, vector<1x1x8x64xbf16>
    %7 = vector.shape_cast %6 : vector<1x1x8x64xbf16> to vector<8x64xbf16>
    %c16 = arith.constant 16 : index
    %c0_14 = arith.constant 0 : index
    %8 = vector.load %arg15[%c16, %c0_14] : memref<200x64xbf16, #tpu.memory_space<vmem>>, vector<8x64xbf16>
    tpu.vector_store %arg15[%c16, %c0_14], %7 {strides = array<i32>} : memref<200x64xbf16, #tpu.memory_space<vmem>>, vector<8x64xbf16>,
    %c0_15 = arith.constant 0 : index
    %c0_16 = arith.constant 0 : index
    %c0_17 = arith.constant 0 : index
    %c0_18 = arith.constant 0 : index
    %9 = vector.load %arg5[%c0_15, %c0_16, %c0_17, %c0_18] : memref<1x1x8x80xbf16, #tpu.memory_space<vmem>>, vector<1x1x8x64xbf16>
    %10 = vector.shape_cast %9 : vector<1x1x8x64xbf16> to vector<8x64xbf16>
    %c24 = arith.constant 24 : index
    %c0_19 = arith.constant 0 : index
    %11 = vector.load %arg15[%c24, %c0_19] : memref<200x64xbf16, #tpu.memory_space<vmem>>, vector<8x64xbf16>
    tpu.vector_store %arg15[%c24, %c0_19], %10 {strides = array<i32>} : memref<200x64xbf16, #tpu.memory_space<vmem>>, vector<8x64xbf16>,
    %c0_20 = arith.constant 0 : index
    %c0_21 = arith.constant 0 : index
    %c0_22 = arith.constant 0 : index
    %c0_23 = arith.constant 0 : index
    %12 = vector.load %arg6[%c0_20, %c0_21, %c0_22, %c0_23] : memref<1x1x8x80xbf16, #tpu.memory_space<vmem>>, vector<1x1x8x64xbf16>
    %13 = vector.shape_cast %12 : vector<1x1x8x64xbf16> to vector<8x64xbf16>
    %c32 = arith.constant 32 : index
    %c0_24 = arith.constant 0 : index
    %14 = vector.load %arg15[%c32, %c0_24] : memref<200x64xbf16, #tpu.memory_space<vmem>>, vector<8x64xbf16>
    tpu.vector_store %arg15[%c32, %c0_24], %13 {strides = array<i32>} : memref<200x64xbf16, #tpu.memory_space<vmem>>, vector<8x64xbf16>,
    %c0_25 = arith.constant 0 : index
    %c0_26 = arith.constant 0 : index
    %c0_27 = arith.constant 0 : index
    %c0_28 = arith.constant 0 : index
    %15 = vector.load %arg7[%c0_25, %c0_26, %c0_27, %c0_28] : memref<1x1x8x80xbf16, #tpu.memory_space<vmem>>, vector<1x1x8x64xbf16>
    %16 = vector.shape_cast %15 : vector<1x1x8x64xbf16> to vector<8x64xbf16>
    %c40 = arith.constant 40 : index
    %c0_29 = arith.constant 0 : index
    %17 = vector.load %arg15[%c40, %c0_29] : memref<200x64xbf16, #tpu.memory_space<vmem>>, vector<8x64xbf16>
    tpu.vector_store %arg15[%c40, %c0_29], %16 {strides = array<i32>} : memref<200x64xbf16, #tpu.memory_space<vmem>>, vector<8x64xbf16>,
    %c0_30 = arith.constant 0 : index
    %c0_31 = arith.constant 0 : index
    %c0_32 = arith.constant 0 : index
    %c0_33 = arith.constant 0 : index
    %18 = vector.load %arg8[%c0_30, %c0_31, %c0_32, %c0_33] : memref<1x1x8x80xbf16, #tpu.memory_space<vmem>>, vector<1x1x8x64xbf16>
    %19 = vector.shape_cast %18 : vector<1x1x8x64xbf16> to vector<8x64xbf16>
    %c48 = arith.constant 48 : index
    %c0_34 = arith.constant 0 : index
    %20 = vector.load %arg15[%c48, %c0_34] : memref<200x64xbf16, #tpu.memory_space<vmem>>, vector<8x64xbf16>
    tpu.vector_store %arg15[%c48, %c0_34], %19 {strides = array<i32>} : memref<200x64xbf16, #tpu.memory_space<vmem>>, vector<8x64xbf16>,
    %c0_35 = arith.constant 0 : index
    %c0_36 = arith.constant 0 : index
    %c0_37 = arith.constant 0 : index
    %c0_38 = arith.constant 0 : index
    %21 = vector.load %arg9[%c0_35, %c0_36, %c0_37, %c0_38] : memref<1x1x8x80xbf16, #tpu.memory_space<vmem>>, vector<1x1x8x64xbf16>
    %22 = vector.shape_cast %21 : vector<1x1x8x64xbf16> to vector<8x64xbf16>
    %c56 = arith.constant 56 : index
    %c0_39 = arith.constant 0 : index
    %23 = vector.load %arg15[%c56, %c0_39] : memref<200x64xbf16, #tpu.memory_space<vmem>>, vector<8x64xbf16>
    tpu.vector_store %arg15[%c56, %c0_39], %22 {strides = array<i32>} : memref<200x64xbf16, #tpu.memory_space<vmem>>, vector<8x64xbf16>,
    %c0_40 = arith.constant 0 : index
    %c0_41 = arith.constant 0 : index
    %c0_42 = arith.constant 0 : index
    %c0_43 = arith.constant 0 : index
    %24 = vector.load %arg10[%c0_40, %c0_41, %c0_42, %c0_43] : memref<1x1x8x80xbf16, #tpu.memory_space<vmem>>, vector<1x1x8x64xbf16>
    %25 = vector.shape_cast %24 : vector<1x1x8x64xbf16> to vector<8x64xbf16>
    %c64 = arith.constant 64 : index
    %c0_44 = arith.constant 0 : index
    %26 = vector.load %arg15[%c64, %c0_44] : memref<200x64xbf16, #tpu.memory_space<vmem>>, vector<8x64xbf16>
    tpu.vector_store %arg15[%c64, %c0_44], %25 {strides = array<i32>} : memref<200x64xbf16, #tpu.memory_space<vmem>>, vector<8x64xbf16>,
    %c0_45 = arith.constant 0 : index
    %c0_46 = arith.constant 0 : index
    %c0_47 = arith.constant 0 : index
    %c0_48 = arith.constant 0 : index
    %27 = vector.load %arg11[%c0_45, %c0_46, %c0_47, %c0_48] : memref<1x1x8x80xbf16, #tpu.memory_space<vmem>>, vector<1x1x8x64xbf16>
    %28 = vector.shape_cast %27 : vector<1x1x8x64xbf16> to vector<8x64xbf16>
    %c72 = arith.constant 72 : index
    %c0_49 = arith.constant 0 : index
    %29 = vector.load %arg15[%c72, %c0_49] : memref<200x64xbf16, #tpu.memory_space<vmem>>, vector<8x64xbf16>
    tpu.vector_store %arg15[%c72, %c0_49], %28 {strides = array<i32>} : memref<200x64xbf16, #tpu.memory_space<vmem>>, vector<8x64xbf16>,
    %c0_50 = arith.constant 0 : index
    %c0_51 = arith.constant 0 : index
    %c0_52 = arith.constant 0 : index
    %c8_53 = arith.constant 8 : index
    %30 = vector.load %arg2[%c0_50, %c0_51, %c0_52, %c8_53] : memref<1x1x8x80xbf16, #tpu.memory_space<vmem>>, vector<1x1x8x64xbf16>
    %31 = vector.shape_cast %30 : vector<1x1x8x64xbf16> to vector<8x64xbf16>
    %c80 = arith.constant 80 : index
    %c0_54 = arith.constant 0 : index
    %32 = vector.load %arg15[%c80, %c0_54] : memref<200x64xbf16, #tpu.memory_space<vmem>>, vector<8x64xbf16>
    tpu.vector_store %arg15[%c80, %c0_54], %31 {strides = array<i32>} : memref<200x64xbf16, #tpu.memory_space<vmem>>, vector<8x64xbf16>,
    %c0_55 = arith.constant 0 : index
    %c0_56 = arith.constant 0 : index
    %c0_57 = arith.constant 0 : index
    %c8_58 = arith.constant 8 : index
    %33 = vector.load %arg3[%c0_55, %c0_56, %c0_57, %c8_58] : memref<1x1x8x80xbf16, #tpu.memory_space<vmem>>, vector<1x1x8x64xbf16>
    %34 = vector.shape_cast %33 : vector<1x1x8x64xbf16> to vector<8x64xbf16>
    %c88 = arith.constant 88 : index
    %c0_59 = arith.constant 0 : index
    %35 = vector.load %arg15[%c88, %c0_59] : memref<200x64xbf16, #tpu.memory_space<vmem>>, vector<8x64xbf16>
    tpu.vector_store %arg15[%c88, %c0_59], %34 {strides = array<i32>} : memref<200x64xbf16, #tpu.memory_space<vmem>>, vector<8x64xbf16>,
    %c0_60 = arith.constant 0 : index
    %c0_61 = arith.constant 0 : index
    %c0_62 = arith.constant 0 : index
    %c8_63 = arith.constant 8 : index
    %36 = vector.load %arg4[%c0_60, %c0_61, %c0_62, %c8_63] : memref<1x1x8x80xbf16, #tpu.memory_space<vmem>>, vector<1x1x8x64xbf16>
    %37 = vector.shape_cast %36 : vector<1x1x8x64xbf16> to vector<8x64xbf16>
    %c96 = arith.constant 96 : index
    %c0_64 = arith.constant 0 : index
    %38 = vector.load %arg15[%c96, %c0_64] : memref<200x64xbf16, #tpu.memory_space<vmem>>, vector<8x64xbf16>
    tpu.vector_store %arg15[%c96, %c0_64], %37 {strides = array<i32>} : memref<200x64xbf16, #tpu.memory_space<vmem>>, vector<8x64xbf16>,
    %c0_65 = arith.constant 0 : index
    %c0_66 = arith.constant 0 : index
    %c0_67 = arith.constant 0 : index
    %c8_68 = arith.constant 8 : index
    %39 = vector.load %arg5[%c0_65, %c0_66, %c0_67, %c8_68] : memref<1x1x8x80xbf16, #tpu.memory_space<vmem>>, vector<1x1x8x64xbf16>
    %40 = vector.shape_cast %39 : vector<1x1x8x64xbf16> to vector<8x64xbf16>
    %c104 = arith.constant 104 : index
    %c0_69 = arith.constant 0 : index
    %41 = vector.load %arg15[%c104, %c0_69] : memref<200x64xbf16, #tpu.memory_space<vmem>>, vector<8x64xbf16>
    tpu.vector_store %arg15[%c104, %c0_69], %40 {strides = array<i32>} : memref<200x64xbf16, #tpu.memory_space<vmem>>, vector<8x64xbf16>,
    %c0_70 = arith.constant 0 : index
    %c0_71 = arith.constant 0 : index
    %c0_72 = arith.constant 0 : index
    %c8_73 = arith.constant 8 : index
    %42 = vector.load %arg6[%c0_70, %c0_71, %c0_72, %c8_73] : memref<1x1x8x80xbf16, #tpu.memory_space<vmem>>, vector<1x1x8x64xbf16>
    %43 = vector.shape_cast %42 : vector<1x1x8x64xbf16> to vector<8x64xbf16>
    %c112 = arith.constant 112 : index
    %c0_74 = arith.constant 0 : index
    %44 = vector.load %arg15[%c112, %c0_74] : memref<200x64xbf16, #tpu.memory_space<vmem>>, vector<8x64xbf16>
    tpu.vector_store %arg15[%c112, %c0_74], %43 {strides = array<i32>} : memref<200x64xbf16, #tpu.memory_space<vmem>>, vector<8x64xbf16>,
    %c0_75 = arith.constant 0 : index
    %c0_76 = arith.constant 0 : index
    %c0_77 = arith.constant 0 : index
    %c8_78 = arith.constant 8 : index
    %45 = vector.load %arg7[%c0_75, %c0_76, %c0_77, %c8_78] : memref<1x1x8x80xbf16, #tpu.memory_space<vmem>>, vector<1x1x8x64xbf16>
    %46 = vector.shape_cast %45 : vector<1x1x8x64xbf16> to vector<8x64xbf16>
    %c120 = arith.constant 120 : index
    %c0_79 = arith.constant 0 : index
    %47 = vector.load %arg15[%c120, %c0_79] : memref<200x64xbf16, #tpu.memory_space<vmem>>, vector<8x64xbf16>
    tpu.vector_store %arg15[%c120, %c0_79], %46 {strides = array<i32>} : memref<200x64xbf16, #tpu.memory_space<vmem>>, vector<8x64xbf16>,
    %c0_80 = arith.constant 0 : index
    %c0_81 = arith.constant 0 : index
    %c0_82 = arith.constant 0 : index
    %c8_83 = arith.constant 8 : index
    %48 = vector.load %arg8[%c0_80, %c0_81, %c0_82, %c8_83] : memref<1x1x8x80xbf16, #tpu.memory_space<vmem>>, vector<1x1x8x64xbf16>
    %49 = vector.shape_cast %48 : vector<1x1x8x64xbf16> to vector<8x64xbf16>
    %c128 = arith.constant 128 : index
    %c0_84 = arith.constant 0 : index
    %50 = vector.load %arg15[%c128, %c0_84] : memref<200x64xbf16, #tpu.memory_space<vmem>>, vector<8x64xbf16>
    tpu.vector_store %arg15[%c128, %c0_84], %49 {strides = array<i32>} : memref<200x64xbf16, #tpu.memory_space<vmem>>, vector<8x64xbf16>,
    %c0_85 = arith.constant 0 : index
    %c0_86 = arith.constant 0 : index
    %c0_87 = arith.constant 0 : index
    %c8_88 = arith.constant 8 : index
    %51 = vector.load %arg9[%c0_85, %c0_86, %c0_87, %c8_88] : memref<1x1x8x80xbf16, #tpu.memory_space<vmem>>, vector<1x1x8x64xbf16>
    %52 = vector.shape_cast %51 : vector<1x1x8x64xbf16> to vector<8x64xbf16>
    %c136 = arith.constant 136 : index
    %c0_89 = arith.constant 0 : index
    %53 = vector.load %arg15[%c136, %c0_89] : memref<200x64xbf16, #tpu.memory_space<vmem>>, vector<8x64xbf16>
    tpu.vector_store %arg15[%c136, %c0_89], %52 {strides = array<i32>} : memref<200x64xbf16, #tpu.memory_space<vmem>>, vector<8x64xbf16>,
    %c0_90 = arith.constant 0 : index
    %c0_91 = arith.constant 0 : index
    %c0_92 = arith.constant 0 : index
    %c8_93 = arith.constant 8 : index
    %54 = vector.load %arg10[%c0_90, %c0_91, %c0_92, %c8_93] : memref<1x1x8x80xbf16, #tpu.memory_space<vmem>>, vector<1x1x8x64xbf16>
    %55 = vector.shape_cast %54 : vector<1x1x8x64xbf16> to vector<8x64xbf16>
    %c144 = arith.constant 144 : index
    %c0_94 = arith.constant 0 : index
    %56 = vector.load %arg15[%c144, %c0_94] : memref<200x64xbf16, #tpu.memory_space<vmem>>, vector<8x64xbf16>
    tpu.vector_store %arg15[%c144, %c0_94], %55 {strides = array<i32>} : memref<200x64xbf16, #tpu.memory_space<vmem>>, vector<8x64xbf16>,
    %c0_95 = arith.constant 0 : index
    %c0_96 = arith.constant 0 : index
    %c0_97 = arith.constant 0 : index
    %c8_98 = arith.constant 8 : index
    %57 = vector.load %arg11[%c0_95, %c0_96, %c0_97, %c8_98] : memref<1x1x8x80xbf16, #tpu.memory_space<vmem>>, vector<1x1x8x64xbf16>
    %58 = vector.shape_cast %57 : vector<1x1x8x64xbf16> to vector<8x64xbf16>
    %c152 = arith.constant 152 : index
    %c0_99 = arith.constant 0 : index
    %59 = vector.load %arg15[%c152, %c0_99] : memref<200x64xbf16, #tpu.memory_space<vmem>>, vector<8x64xbf16>
    tpu.vector_store %arg15[%c152, %c0_99], %58 {strides = array<i32>} : memref<200x64xbf16, #tpu.memory_space<vmem>>, vector<8x64xbf16>,
    %c0_100 = arith.constant 0 : index
    %c0_101 = arith.constant 0 : index
    %c0_102 = arith.constant 0 : index
    %c16_103 = arith.constant 16 : index
    %60 = vector.load %arg2[%c0_100, %c0_101, %c0_102, %c16_103] : memref<1x1x8x80xbf16, #tpu.memory_space<vmem>>, vector<1x1x8x64xbf16>
    %61 = vector.shape_cast %60 : vector<1x1x8x64xbf16> to vector<8x64xbf16>
    %c160 = arith.constant 160 : index
    %c0_104 = arith.constant 0 : index
    %62 = vector.load %arg15[%c160, %c0_104] : memref<200x64xbf16, #tpu.memory_space<vmem>>, vector<8x64xbf16>
    tpu.vector_store %arg15[%c160, %c0_104], %61 {strides = array<i32>} : memref<200x64xbf16, #tpu.memory_space<vmem>>, vector<8x64xbf16>,
    %c0_105 = arith.constant 0 : index
    %c0_106 = arith.constant 0 : index
    %c0_107 = arith.constant 0 : index
    %c16_108 = arith.constant 16 : index
    %63 = vector.load %arg3[%c0_105, %c0_106, %c0_107, %c16_108] : memref<1x1x8x80xbf16, #tpu.memory_space<vmem>>, vector<1x1x8x64xbf16>
    %64 = vector.shape_cast %63 : vector<1x1x8x64xbf16> to vector<8x64xbf16>
    %c168 = arith.constant 168 : index
    %c0_109 = arith.constant 0 : index
    %65 = vector.load %arg15[%c168, %c0_109] : memref<200x64xbf16, #tpu.memory_space<vmem>>, vector<8x64xbf16>
    tpu.vector_store %arg15[%c168, %c0_109], %64 {strides = array<i32>} : memref<200x64xbf16, #tpu.memory_space<vmem>>, vector<8x64xbf16>,
    %c0_110 = arith.constant 0 : index
    %c0_111 = arith.constant 0 : index
    %c0_112 = arith.constant 0 : index
    %c16_113 = arith.constant 16 : index
    %66 = vector.load %arg4[%c0_110, %c0_111, %c0_112, %c16_113] : memref<1x1x8x80xbf16, #tpu.memory_space<vmem>>, vector<1x1x8x64xbf16>
    %67 = vector.shape_cast %66 : vector<1x1x8x64xbf16> to vector<8x64xbf16>
    %c176 = arith.constant 176 : index
    %c0_114 = arith.constant 0 : index
    %68 = vector.load %arg15[%c176, %c0_114] : memref<200x64xbf16, #tpu.memory_space<vmem>>, vector<8x64xbf16>
    tpu.vector_store %arg15[%c176, %c0_114], %67 {strides = array<i32>} : memref<200x64xbf16, #tpu.memory_space<vmem>>, vector<8x64xbf16>,
    %c0_115 = arith.constant 0 : index
    %c0_116 = arith.constant 0 : index
    %c0_117 = arith.constant 0 : index
    %c16_118 = arith.constant 16 : index
    %69 = vector.load %arg5[%c0_115, %c0_116, %c0_117, %c16_118] : memref<1x1x8x80xbf16, #tpu.memory_space<vmem>>, vector<1x1x8x64xbf16>
    %70 = vector.shape_cast %69 : vector<1x1x8x64xbf16> to vector<8x64xbf16>
    %c184 = arith.constant 184 : index
    %c0_119 = arith.constant 0 : index
    %71 = vector.load %arg15[%c184, %c0_119] : memref<200x64xbf16, #tpu.memory_space<vmem>>, vector<8x64xbf16>
    tpu.vector_store %arg15[%c184, %c0_119], %70 {strides = array<i32>} : memref<200x64xbf16, #tpu.memory_space<vmem>>, vector<8x64xbf16>,
    %c0_120 = arith.constant 0 : index
    %c0_121 = arith.constant 0 : index
    %c0_122 = arith.constant 0 : index
    %c16_123 = arith.constant 16 : index
    %72 = vector.load %arg6[%c0_120, %c0_121, %c0_122, %c16_123] : memref<1x1x8x80xbf16, #tpu.memory_space<vmem>>, vector<1x1x8x64xbf16>
    %73 = vector.shape_cast %72 : vector<1x1x8x64xbf16> to vector<8x64xbf16>
    %c192 = arith.constant 192 : index
    %c0_124 = arith.constant 0 : index
    %74 = vector.load %arg15[%c192, %c0_124] : memref<200x64xbf16, #tpu.memory_space<vmem>>, vector<8x64xbf16>
    tpu.vector_store %arg15[%c192, %c0_124], %73 {strides = array<i32>} : memref<200x64xbf16, #tpu.memory_space<vmem>>, vector<8x64xbf16>,
    %c0_125 = arith.constant 0 : index
    %c0_126 = arith.constant 0 : index
    %75 = vector.load %arg12[%c0_125, %c0_126] : memref<8x200xbf16, #tpu.memory_space<vmem>>, vector<8x200xbf16>
    %c0_127 = arith.constant 0 : index
    %c0_128 = arith.constant 0 : index
    %76 = vector.load %arg15[%c0_127, %c0_128] : memref<200x64xbf16, #tpu.memory_space<vmem>>, vector<200x64xbf16>
    %cst = arith.constant dense<0.000000e+00> : vector<8x64xf32>
    %77 = tpu.matmul %75, %76, %cst {dimension_numbers = #tpu.dot_dimension_numbers<[1], [0], [0], [1], [0, 0, 1, 1], [], []>} : vector<8x200xbf16>, vector<200x64xbf16>, vector<8x64xf32> -> vector<8x64xf32>
    %c0_129 = arith.constant 0 : index
    %c0_130 = arith.constant 0 : index
    %78 = vector.load %arg13[%c0_129, %c0_130] : memref<8x1xf32, #tpu.memory_space<vmem>>, vector<8x1xf32>
    %79 = vector.broadcast %78 : vector<8x1xf32> to vector<8x64xf32>
    %80 = arith.addf %77, %79 : vector<8x64xf32>
    %cst_131 = arith.constant 0.000000e+00 : f32
    %81 = vector.broadcast %cst_131 : f32 to vector<8x64xf32>
    %82 = arith.cmpf ogt, %80, %81 : vector<8x64xf32>
    %cst_132 = arith.constant 1.000000e-01 : f32
    %83 = vector.broadcast %cst_132 : f32 to vector<8x64xf32>
    %84 = arith.mulf %83, %80 : vector<8x64xf32>
    %85 = arith.select %82, %80, %84 : vector<8x64xi1>, vector<8x64xf32>
    %c0_133 = arith.constant 0 : index
    %c0_134 = arith.constant 0 : index
    %c0_135 = arith.constant 0 : index
    %86 = vector.load %arg14[%c0_133, %c0_134, %c0_135] : memref<1x8x64xf32, #tpu.memory_space<vmem>>, vector<1x8x64xf32>
    %87 = vector.shape_cast %86 : vector<1x8x64xf32> to vector<8x64xf32>
    %88 = vector.shape_cast %85 : vector<8x64xf32> to vector<1x8x64xf32>
    tpu.vector_store %arg14[%c0_133, %c0_134, %c0_135], %88 {strides = array<i32>} : memref<1x8x64xf32, #tpu.memory_space<vmem>>, vector<1x8x64xf32>,
    return
  }
  func.func @transform_0(%arg0: i32, %arg1: i32) -> (i32, i32, i32, i32) {
    %c0_i32 = arith.constant 0 : i32
    %c0_i32_0 = arith.constant 0 : i32
    %c0_i32_1 = arith.constant 0 : i32
    return %arg0, %arg1, %c0_i32, %c0_i32_0 : i32, i32, i32, i32
  }
  func.func @transform_1(%arg0: i32, %arg1: i32) -> (i32, i32, i32, i32) {
    %c0_i32 = arith.constant 0 : i32
    %c0_i32_0 = arith.constant 0 : i32
    %c0_i32_1 = arith.constant 0 : i32
    return %arg0, %arg1, %c0_i32, %c0_i32_0 : i32, i32, i32, i32
  }
  func.func @transform_2(%arg0: i32, %arg1: i32) -> (i32, i32, i32, i32) {
    %c0_i32 = arith.constant 0 : i32
    %c0_i32_0 = arith.constant 0 : i32
    %c0_i32_1 = arith.constant 0 : i32
    return %arg0, %arg1, %c0_i32, %c0_i32_0 : i32, i32, i32, i32
  }
  func.func @transform_3(%arg0: i32, %arg1: i32) -> (i32, i32, i32, i32) {
    %c0_i32 = arith.constant 0 : i32
    %c0_i32_0 = arith.constant 0 : i32
    %c0_i32_1 = arith.constant 0 : i32
    return %arg0, %arg1, %c0_i32, %c0_i32_0 : i32, i32, i32, i32
  }
  func.func @transform_4(%arg0: i32, %arg1: i32) -> (i32, i32, i32, i32) {
    %c0_i32 = arith.constant 0 : i32
    %c0_i32_0 = arith.constant 0 : i32
    %c0_i32_1 = arith.constant 0 : i32
    return %arg0, %arg1, %c0_i32, %c0_i32_0 : i32, i32, i32, i32
  }
  func.func @transform_5(%arg0: i32, %arg1: i32) -> (i32, i32, i32, i32) {
    %c0_i32 = arith.constant 0 : i32
    %c0_i32_0 = arith.constant 0 : i32
    %c0_i32_1 = arith.constant 0 : i32
    return %arg0, %arg1, %c0_i32, %c0_i32_0 : i32, i32, i32, i32
  }
  func.func @transform_6(%arg0: i32, %arg1: i32) -> (i32, i32, i32, i32) {
    %c0_i32 = arith.constant 0 : i32
    %c0_i32_0 = arith.constant 0 : i32
    %c0_i32_1 = arith.constant 0 : i32
    return %arg0, %arg1, %c0_i32, %c0_i32_0 : i32, i32, i32, i32
  }
  func.func @transform_7(%arg0: i32, %arg1: i32) -> (i32, i32, i32, i32) {
    %c0_i32 = arith.constant 0 : i32
    %c0_i32_0 = arith.constant 0 : i32
    %c0_i32_1 = arith.constant 0 : i32
    return %arg0, %arg1, %c0_i32, %c0_i32_0 : i32, i32, i32, i32
  }
  func.func @transform_8(%arg0: i32, %arg1: i32) -> (i32, i32, i32, i32) {
    %c0_i32 = arith.constant 0 : i32
    %c0_i32_0 = arith.constant 0 : i32
    %c0_i32_1 = arith.constant 0 : i32
    return %arg0, %arg1, %c0_i32, %c0_i32_0 : i32, i32, i32, i32
  }
  func.func @transform_9(%arg0: i32, %arg1: i32) -> (i32, i32, i32, i32) {
    %c0_i32 = arith.constant 0 : i32
    %c0_i32_0 = arith.constant 0 : i32
    %c0_i32_1 = arith.constant 0 : i32
    return %arg0, %arg1, %c0_i32, %c0_i32_0 : i32, i32, i32, i32
  }
  func.func @transform_10(%arg0: i32, %arg1: i32) -> (i32, i32) {
    %c0_i32 = arith.constant 0 : i32
    %c0_i32_0 = arith.constant 0 : i32
    %c0_i32_1 = arith.constant 0 : i32
    return %c0_i32, %c0_i32_0 : i32, i32
  }
  func.func @transform_11(%arg0: i32, %arg1: i32) -> (i32, i32) {
    %c0_i32 = arith.constant 0 : i32
    %c0_i32_0 = arith.constant 0 : i32
    %c0_i32_1 = arith.constant 0 : i32
    return %c0_i32, %c0_i32_0 : i32, i32
  }
  func.func @transform_12(%arg0: i32, %arg1: i32) -> (i32, i32, i32) {
    %c0_i32 = arith.constant 0 : i32
    %c0_i32_0 = arith.constant 0 : i32
    return %arg0, %c0_i32, %arg1 : i32, i32, i32
  }
}

</mosaic_0001>

<llo_original>
// kernel: conv_block_forward.1
$region0: #{conv_block_forward.1}
  #allocation0 [shape = 'u32[]', space=smem, size = 0x4, offset = 0x4, fixed_abs, tag = 'smem constant byte address 0x4 - core index']
  #allocation1 [shape = 'u32[144,128]{1,0:T(1,128)}', space=vmem, size = 0x12000, scoped, tag = 'internal scratch']
  #allocation2 [shape = 'bf16[200,64]{1,0:T(8,128)(2,1)}', space=vmem, size = 0xc800, scoped, tag = 'scratch operand']
  %s0 = inlined_call_operand.vmem [shape: bf16[2,1,8,80], index: 0, kind: input, shape index: {}]
  %s1 = inlined_call_operand.vmem [shape: bf16[2,1,8,80], index: 1, kind: input, shape index: {}]
  %s2 = inlined_call_operand.vmem [shape: bf16[2,1,8,80], index: 2, kind: input, shape index: {}]
  %s3 = inlined_call_operand.vmem [shape: bf16[2,1,8,80], index: 3, kind: input, shape index: {}]
  %s4 = inlined_call_operand.vmem [shape: bf16[2,1,8,80], index: 4, kind: input, shape index: {}]
  %s5 = inlined_call_operand.vmem [shape: bf16[2,1,8,80], index: 5, kind: input, shape index: {}]
  %s6 = inlined_call_operand.vmem [shape: bf16[2,1,8,80], index: 6, kind: input, shape index: {}]
  %s7 = inlined_call_operand.vmem [shape: bf16[2,1,8,80], index: 7, kind: input, shape index: {}]
  %s8 = inlined_call_operand.vmem [shape: bf16[2,1,8,80], index: 8, kind: input, shape index: {}]
  %s9 = inlined_call_operand.vmem [shape: bf16[2,1,8,80], index: 9, kind: input, shape index: {}]
  %s10 = inlined_call_operand.vmem [shape: bf16[8,200], index: 10, kind: input, shape index: {}]
  %s11 = inlined_call_operand.vmem [shape: f32[8,1], index: 11, kind: input, shape index: {}]
  %s12 = inlined_call_operand.vmem [shape: f32[2,8,64], index: 12, kind: output, shape index: {}]
  %s13 = sld [smem:[#allocation0]]
  $region81: #{conv_block_forward.1} parent=0
    _
  %s15 = ssub.s32 1, %s13
  %s16 = scalar_select 0, %s15, %s13
  loop: start=0, step=1, limit=4
  $region2: #{conv_block_forward.1} parent=0 // loop_pre_header
    _
  $region3: #{conv_block_forward.1} parent=0 // loop_header
    %s18 = sphi 0, %s22
    %p19 = scmp.ge.s32.totalorder %s18, 4
    %s25 = sphi 0, %s37
    %s26 = sphi 0, %s33
    %s27 = sphi 0, %s25
    %s28 = sphi 0, %s26
    %s29 = sphi 0, %s27
    %s30 = sphi 0, %s28
    %s42 = sphi 0, %s44
    %s45 = sphi 0, %s42
    %s46 = sphi 0, %s45
    %s62 = sphi 0, %s46
    %s70 = sphi 0, %s72
    %s73 = sphi 0, %s70
    %s74 = sphi 0, %s73
    %s90 = sphi 0, %s74
    %s98 = sphi 0, %s100
    %s101 = sphi 0, %s98
    %s102 = sphi 0, %s101
    %s118 = sphi 0, %s102
    %s126 = sphi 0, %s128
    %s129 = sphi 0, %s126
    %s130 = sphi 0, %s129
    %s146 = sphi 0, %s130
    %s154 = sphi 0, %s156
    %s157 = sphi 0, %s154
    %s158 = sphi 0, %s157
    %s174 = sphi 0, %s158
    %s182 = sphi 0, %s184
    %s185 = sphi 0, %s182
    %s186 = sphi 0, %s185
    %s202 = sphi 0, %s186
    %s210 = sphi 0, %s212
    %s213 = sphi 0, %s210
    %s214 = sphi 0, %s213
    %s230 = sphi 0, %s214
    %s238 = sphi 0, %s240
    %s241 = sphi 0, %s238
    %s242 = sphi 0, %s241
    %s258 = sphi 0, %s242
    %s266 = sphi 0, %s268
    %s269 = sphi 0, %s266
    %s270 = sphi 0, %s269
    %s286 = sphi 0, %s270
    %s294 = sphi 0, %s296
    %s297 = sphi 0, %s294
    %s298 = sphi 0, %s297
    %s314 = sphi 0, %s298
    %s318 = sphi 0, %s318
    %s320 = sphi 0, %s318
    %s321 = sphi 0, %s320
    %s335 = sphi 0, %s321
    %s339 = sphi 0, %s339
    %s341 = sphi 0, %s339
    %s342 = sphi 0, %s341
    %s356 = sphi 0, %s342
    %s364 = sphi 0, %s366
    %s367 = sphi 0, %s364
    %s368 = sphi 0, %s367
    %s384 = sphi 0, %s368
  $region4: #{conv_block_forward.1} parent=0 // loop_header_branch
    %21 = sbr.rel (%p19) target = $region8
  $region5: #{conv_block_forward.1} parent=0 // loop_body
    %s23 = ssub.s32 %s18, 1
    %s24 = ssub.s32 %s18, 2
    %s31 = sadd.s32 1, %s26
    %p32 = scmp.ge.s32.totalorder %s31, 1
    %s33 = scalar_select %p32, 0, %s31
    %s34 = sadd.s32 1, %s25
    %s35 = scalar_select %p32, %s34, %s25
    %p36 = scmp.ge.s32.totalorder %s35, 2
    %s37 = scalar_select %p36, 0, %s35
    %s38 = ssub.s32 %s25, %s37
    %s39 = ssub.s32 %s26, %s33
    %s40 = sor.u32 %s38, %s39
    %p41 = scmp.eq.s32.totalorder %s40, 0
    %s43 = sadd.s32 %s42, 1
    %s44 = scalar_select %p41, %s42, %s43
    %p47 = pneg %p41
    %p48 = scmp.eq.s32.totalorder %s18, 1
    %p49 = por %p47, %p48
    %p50 = scmp.ne.s32.totalorder %s42, %s45
    %p51 = scmp.eq.s32.totalorder %s18, 0
    %p52 = por %p50, %p51
    %p53 = scmp.ne.s32.totalorder %s42, %s45
    %p54 = scmp.eq.s32.totalorder %s23, 1
    %p55 = por %p53, %p54
    %p56 = scmp.ne.s32.totalorder %s45, %s46
    %p57 = scmp.eq.s32.totalorder %s23, 0
    %p58 = por %p56, %p57
    %p59 = scmp.ne.s32.totalorder %s45, %s46
    %p60 = scmp.eq.s32.totalorder %s24, 1
    %p61 = por %p59, %p60
    %p63 = scmp.ne.s32.totalorder %s46, %s62
    %p64 = scmp.eq.s32.totalorder %s24, 0
    %p65 = por %p63, %p64
    %s66 = ssub.s32 %s25, %s37
    %s67 = ssub.s32 %s26, %s33
    %s68 = sor.u32 %s66, %s67
    %p69 = scmp.eq.s32.totalorder %s68, 0
    %s71 = sadd.s32 %s70, 1
    %s72 = scalar_select %p69, %s70, %s71
    %p75 = pneg %p69
    %p76 = scmp.eq.s32.totalorder %s18, 1
    %p77 = por %p75, %p76
    %p78 = scmp.ne.s32.totalorder %s70, %s73
    %p79 = scmp.eq.s32.totalorder %s18, 0
    %p80 = por %p78, %p79
    %p81 = scmp.ne.s32.totalorder %s70, %s73
    %p82 = scmp.eq.s32.totalorder %s23, 1
    %p83 = por %p81, %p82
    %p84 = scmp.ne.s32.totalorder %s73, %s74
    %p85 = scmp.eq.s32.totalorder %s23, 0
    %p86 = por %p84, %p85
    %p87 = scmp.ne.s32.totalorder %s73, %s74
    %p88 = scmp.eq.s32.totalorder %s24, 1
    %p89 = por %p87, %p88
    %p91 = scmp.ne.s32.totalorder %s74, %s90
    %p92 = scmp.eq.s32.totalorder %s24, 0
    %p93 = por %p91, %p92
    %s94 = ssub.s32 %s25, %s37
    %s95 = ssub.s32 %s26, %s33
    %s96 = sor.u32 %s94, %s95
    %p97 = scmp.eq.s32.totalorder %s96, 0
    %s99 = sadd.s32 %s98, 1
    %s100 = scalar_select %p97, %s98, %s99
    %p103 = pneg %p97
    %p104 = scmp.eq.s32.totalorder %s18, 1
    %p105 = por %p103, %p104
    %p106 = scmp.ne.s32.totalorder %s98, %s101
    %p107 = scmp.eq.s32.totalorder %s18, 0
    %p108 = por %p106, %p107
    %p109 = scmp.ne.s32.totalorder %s98, %s101
    %p110 = scmp.eq.s32.totalorder %s23, 1
    %p111 = por %p109, %p110
    %p112 = scmp.ne.s32.totalorder %s101, %s102
    %p113 = scmp.eq.s32.totalorder %s23, 0
    %p114 = por %p112, %p113
    %p115 = scmp.ne.s32.totalorder %s101, %s102
    %p116 = scmp.eq.s32.totalorder %s24, 1
    %p117 = por %p115, %p116
    %p119 = scmp.ne.s32.totalorder %s102, %s118
    %p120 = scmp.eq.s32.totalorder %s24, 0
    %p121 = por %p119, %p120
    %s122 = ssub.s32 %s25, %s37
    %s123 = ssub.s32 %s26, %s33
    %s124 = sor.u32 %s122, %s123
    %p125 = scmp.eq.s32.totalorder %s124, 0
    %s127 = sadd.s32 %s126, 1
    %s128 = scalar_select %p125, %s126, %s127
    %p131 = pneg %p125
    %p132 = scmp.eq.s32.totalorder %s18, 1
    %p133 = por %p131, %p132
    %p134 = scmp.ne.s32.totalorder %s126, %s129
    %p135 = scmp.eq.s32.totalorder %s18, 0
    %p136 = por %p134, %p135
    %p137 = scmp.ne.s32.totalorder %s126, %s129
    %p138 = scmp.eq.s32.totalorder %s23, 1
    %p139 = por %p137, %p138
    %p140 = scmp.ne.s32.totalorder %s129, %s130
    %p141 = scmp.eq.s32.totalorder %s23, 0
    %p142 = por %p140, %p141
    %p143 = scmp.ne.s32.totalorder %s129, %s130
    %p144 = scmp.eq.s32.totalorder %s24, 1
    %p145 = por %p143, %p144
    %p147 = scmp.ne.s32.totalorder %s130, %s146
    %p148 = scmp.eq.s32.totalorder %s24, 0
    %p149 = por %p147, %p148
    %s150 = ssub.s32 %s25, %s37
    %s151 = ssub.s32 %s26, %s33
    %s152 = sor.u32 %s150, %s151
    %p153 = scmp.eq.s32.totalorder %s152, 0
    %s155 = sadd.s32 %s154, 1
    %s156 = scalar_select %p153, %s154, %s155
    %p159 = pneg %p153
    %p160 = scmp.eq.s32.totalorder %s18, 1
    %p161 = por %p159, %p160
    %p162 = scmp.ne.s32.totalorder %s154, %s157
    %p163 = scmp.eq.s32.totalorder %s18, 0
    %p164 = por %p162, %p163
    %p165 = scmp.ne.s32.totalorder %s154, %s157
    %p166 = scmp.eq.s32.totalorder %s23, 1
    %p167 = por %p165, %p166
    %p168 = scmp.ne.s32.totalorder %s157, %s158
    %p169 = scmp.eq.s32.totalorder %s23, 0
    %p170 = por %p168, %p169
    %p171 = scmp.ne.s32.totalorder %s157, %s158
    %p172 = scmp.eq.s32.totalorder %s24, 1
    %p173 = por %p171, %p172
    %p175 = scmp.ne.s32.totalorder %s158, %s174
    %p176 = scmp.eq.s32.totalorder %s24, 0
    %p177 = por %p175, %p176
    %s178 = ssub.s32 %s25, %s37
    %s179 = ssub.s32 %s26, %s33
    %s180 = sor.u32 %s178, %s179
    %p181 = scmp.eq.s32.totalorder %s180, 0
    %s183 = sadd.s32 %s182, 1
    %s184 = scalar_select %p181, %s182, %s183
    %p187 = pneg %p181
    %p188 = scmp.eq.s32.totalorder %s18, 1
    %p189 = por %p187, %p188
    %p190 = scmp.ne.s32.totalorder %s182, %s185
    %p191 = scmp.eq.s32.totalorder %s18, 0
    %p192 = por %p190, %p191
    %p193 = scmp.ne.s32.totalorder %s182, %s185
    %p194 = scmp.eq.s32.totalorder %s23, 1
    %p195 = por %p193, %p194
    %p196 = scmp.ne.s32.totalorder %s185, %s186
    %p197 = scmp.eq.s32.totalorder %s23, 0
    %p198 = por %p196, %p197
    %p199 = scmp.ne.s32.totalorder %s185, %s186
    %p200 = scmp.eq.s32.totalorder %s24, 1
    %p201 = por %p199, %p200
    %p203 = scmp.ne.s32.totalorder %s186, %s202
    %p204 = scmp.eq.s32.totalorder %s24, 0
    %p205 = por %p203, %p204
    %s206 = ssub.s32 %s25, %s37
    %s207 = ssub.s32 %s26, %s33
    %s208 = sor.u32 %s206, %s207
    %p209 = scmp.eq.s32.totalorder %s208, 0
    %s211 = sadd.s32 %s210, 1
    %s212 = scalar_select %p209, %s210, %s211
    %p215 = pneg %p209
    %p216 = scmp.eq.s32.totalorder %s18, 1
    %p217 = por %p215, %p216
    %p218 = scmp.ne.s32.totalorder %s210, %s213
    %p219 = scmp.eq.s32.totalorder %s18, 0
    %p220 = por %p218, %p219
    %p221 = scmp.ne.s32.totalorder %s210, %s213
    %p222 = scmp.eq.s32.totalorder %s23, 1
    %p223 = por %p221, %p222
    %p224 = scmp.ne.s32.totalorder %s213, %s214
    %p225 = scmp.eq.s32.totalorder %s23, 0
    %p226 = por %p224, %p225
    %p227 = scmp.ne.s32.totalorder %s213, %s214
    %p228 = scmp.eq.s32.totalorder %s24, 1
    %p229 = por %p227, %p228
    %p231 = scmp.ne.s32.totalorder %s214, %s230
    %p232 = scmp.eq.s32.totalorder %s24, 0
    %p233 = por %p231, %p232
    %s234 = ssub.s32 %s25, %s37
    %s235 = ssub.s32 %s26, %s33
    %s236 = sor.u32 %s234, %s235
    %p237 = scmp.eq.s32.totalorder %s236, 0
    %s239 = sadd.s32 %s238, 1
    %s240 = scalar_select %p237, %s238, %s239
    %p243 = pneg %p237
    %p244 = scmp.eq.s32.totalorder %s18, 1
    %p245 = por %p243, %p244
    %p246 = scmp.ne.s32.totalorder %s238, %s241
    %p247 = scmp.eq.s32.totalorder %s18, 0
    %p248 = por %p246, %p247
    %p249 = scmp.ne.s32.totalorder %s238, %s241
    %p250 = scmp.eq.s32.totalorder %s23, 1
    %p251 = por %p249, %p250
    %p252 = scmp.ne.s32.totalorder %s241, %s242
    %p253 = scmp.eq.s32.totalorder %s23, 0
    %p254 = por %p252, %p253
    %p255 = scmp.ne.s32.totalorder %s241, %s242
    %p256 = scmp.eq.s32.totalorder %s24, 1
    %p257 = por %p255, %p256
    %p259 = scmp.ne.s32.totalorder %s242, %s258
    %p260 = scmp.eq.s32.totalorder %s24, 0
    %p261 = por %p259, %p260
    %s262 = ssub.s32 %s25, %s37
    %s263 = ssub.s32 %s26, %s33
    %s264 = sor.u32 %s262, %s263
    %p265 = scmp.eq.s32.totalorder %s264, 0
    %s267 = sadd.s32 %s266, 1
    %s268 = scalar_select %p265, %s266, %s267
    %p271 = pneg %p265
    %p272 = scmp.eq.s32.totalorder %s18, 1
    %p273 = por %p271, %p272
    %p274 = scmp.ne.s32.totalorder %s266, %s269
    %p275 = scmp.eq.s32.totalorder %s18, 0
    %p276 = por %p274, %p275
    %p277 = scmp.ne.s32.totalorder %s266, %s269
    %p278 = scmp.eq.s32.totalorder %s23, 1
    %p279 = por %p277, %p278
    %p280 = scmp.ne.s32.totalorder %s269, %s270
    %p281 = scmp.eq.s32.totalorder %s23, 0
    %p282 = por %p280, %p281
    %p283 = scmp.ne.s32.totalorder %s269, %s270
    %p284 = scmp.eq.s32.totalorder %s24, 1
    %p285 = por %p283, %p284
    %p287 = scmp.ne.s32.totalorder %s270, %s286
    %p288 = scmp.eq.s32.totalorder %s24, 0
    %p289 = por %p287, %p288
    %s290 = ssub.s32 %s25, %s37
    %s291 = ssub.s32 %s26, %s33
    %s292 = sor.u32 %s290, %s291
    %p293 = scmp.eq.s32.totalorder %s292, 0
    %s295 = sadd.s32 %s294, 1
    %s296 = scalar_select %p293, %s294, %s295
    %p299 = pneg %p293
    %p300 = scmp.eq.s32.totalorder %s18, 1
    %p301 = por %p299, %p300
    %p302 = scmp.ne.s32.totalorder %s294, %s297
    %p303 = scmp.eq.s32.totalorder %s18, 0
    %p304 = por %p302, %p303
    %p305 = scmp.ne.s32.totalorder %s294, %s297
    %p306 = scmp.eq.s32.totalorder %s23, 1
    %p307 = por %p305, %p306
    %p308 = scmp.ne.s32.totalorder %s297, %s298
    %p309 = scmp.eq.s32.totalorder %s23, 0
    %p310 = por %p308, %p309
    %p311 = scmp.ne.s32.totalorder %s297, %s298
    %p312 = scmp.eq.s32.totalorder %s24, 1
    %p313 = por %p311, %p312
    %p315 = scmp.ne.s32.totalorder %s298, %s314
    %p316 = scmp.eq.s32.totalorder %s24, 0
    %p317 = por %p315, %p316
    %s319 = sadd.s32 %s318, 1
    %p322 = scmp.eq.s32.totalorder %s18, 1
    %p323 = scmp.ne.s32.totalorder %s318, %s320
    %p324 = scmp.eq.s32.totalorder %s18, 0
    %p325 = por %p323, %p324
    %p326 = scmp.ne.s32.totalorder %s318, %s320
    %p327 = scmp.eq.s32.totalorder %s23, 1
    %p328 = por %p326, %p327
    %p329 = scmp.ne.s32.totalorder %s320, %s321
    %p330 = scmp.eq.s32.totalorder %s23, 0
    %p331 = por %p329, %p330
    %p332 = scmp.ne.s32.totalorder %s320, %s321
    %p333 = scmp.eq.s32.totalorder %s24, 1
    %p334 = por %p332, %p333
    %p336 = scmp.ne.s32.totalorder %s321, %s335
    %p337 = scmp.eq.s32.totalorder %s24, 0
    %p338 = por %p336, %p337
    %s340 = sadd.s32 %s339, 1
    %p343 = scmp.eq.s32.totalorder %s18, 1
    %p344 = scmp.ne.s32.totalorder %s339, %s341
    %p345 = scmp.eq.s32.totalorder %s18, 0
    %p346 = por %p344, %p345
    %p347 = scmp.ne.s32.totalorder %s339, %s341
    %p348 = scmp.eq.s32.totalorder %s23, 1
    %p349 = por %p347, %p348
    %p350 = scmp.ne.s32.totalorder %s341, %s342
    %p351 = scmp.eq.s32.totalorder %s23, 0
    %p352 = por %p350, %p351
    %p353 = scmp.ne.s32.totalorder %s341, %s342
    %p354 = scmp.eq.s32.totalorder %s24, 1
    %p355 = por %p353, %p354
    %p357 = scmp.ne.s32.totalorder %s342, %s356
    %p358 = scmp.eq.s32.totalorder %s24, 0
    %p359 = por %p357, %p358
    %s360 = ssub.s32 %s25, %s37
    %s361 = ssub.s32 %s26, %s33
    %s362 = sor.u32 %s360, %s361
    %p363 = scmp.eq.s32.totalorder %s362, 0
    %s365 = sadd.s32 %s364, 1
    %s366 = scalar_select %p363, %s364, %s365
    %p369 = pneg %p363
    %p370 = scmp.eq.s32.totalorder %s18, 1
    %p371 = por %p369, %p370
    %p372 = scmp.ne.s32.totalorder %s364, %s367
    %p373 = scmp.eq.s32.totalorder %s18, 0
    %p374 = por %p372, %p373
    %p375 = scmp.ne.s32.totalorder %s364, %s367
    %p376 = scmp.eq.s32.totalorder %s23, 1
    %p377 = por %p375, %p376
    %p378 = scmp.ne.s32.totalorder %s367, %s368
    %p379 = scmp.eq.s32.totalorder %s23, 0
    %p380 = por %p378, %p379
    %p381 = scmp.ne.s32.totalorder %s367, %s368
    %p382 = scmp.eq.s32.totalorder %s24, 1
    %p383 = por %p381, %p382
    %p385 = scmp.ne.s32.totalorder %s368, %s384
    %p386 = scmp.eq.s32.totalorder %s24, 0
    %p387 = por %p385, %p386
    %p388 = scmp.le.s32.totalorder 1, %s18
    %p389 = scmp.lt.s32.totalorder %s18, 3
    %p390 = pnand %p388, %p389
    %p391 = pneg %p390
    // Predicated region
    $region9: #{conv_block_forward.1} parent=5 // pred_check
      _
    $region10: #{conv_block_forward.1} parent=5 // pred_check_branch
      %393 = sbr.rel (%p390) target = $region12
    $region11: #{conv_block_forward.1} parent=5 // pred_region
      %s394 = ssub.s32 %s18, 1
      // Predicated region
      $region13: #{conv_block_forward.1} parent=11 // pred_check
        %p395 = pneg %p331
      $region14: #{conv_block_forward.1} parent=11 // pred_check_branch
        %397 = sbr.rel (%p395) target = $region16
      $region15: #{conv_block_forward.1} parent=11 // pred_region
        _
      $region16: #{conv_block_forward.1} parent=11 // pred_fallthru
        _
      // Predicated region
      $region17: #{conv_block_forward.1} parent=11 // pred_check
        %p398 = pneg %p352
      $region18: #{conv_block_forward.1} parent=11 // pred_check_branch
        %400 = sbr.rel (%p398) target = $region20
      $region19: #{conv_block_forward.1} parent=11 // pred_region
        _
      $region20: #{conv_block_forward.1} parent=11 // pred_fallthru
        _
    $region12: #{conv_block_forward.1} parent=5 // pred_fallthru
      _
    %p401 = scmp.lt.s32.totalorder %s18, 2
    // Predicated region
    $region21: #{conv_block_forward.1} parent=5 // pred_check
      %p402 = pneg %p401
    $region22: #{conv_block_forward.1} parent=5 // pred_check_branch
      %404 = sbr.rel (%p402) target = $region24
    $region23: #{conv_block_forward.1} parent=5 // pred_region
      // Predicated region
      $region25: #{conv_block_forward.1} parent=23 // pred_check
        %p405 = pneg %p52
      $region26: #{conv_block_forward.1} parent=23 // pred_check_branch
        %407 = sbr.rel (%p405) target = $region28
      $region27: #{conv_block_forward.1} parent=23 // pred_region
        %p408 = scmp.lt.s32.totalorder %s25, 1
        %s409 = scalar_select %p408, %s25, 1
        %p410 = scmp.lt.s32.totalorder %s26, 0
        %s411 = scalar_select %p410, %s26, 0
        %s412 = sadd.s32 %s411, %s409
        %s413 = smul.addr %s412, 4
        %s414 = scalar_lea.vmem %s0, %s413
      $region28: #{conv_block_forward.1} parent=23 // pred_fallthru
        _
      // Predicated region
      $region29: #{conv_block_forward.1} parent=23 // pred_check
        %p415 = pneg %p80
      $region30: #{conv_block_forward.1} parent=23 // pred_check_branch
        %417 = sbr.rel (%p415) target = $region32
      $region31: #{conv_block_forward.1} parent=23 // pred_region
        %p418 = scmp.lt.s32.totalorder %s25, 1
        %s419 = scalar_select %p418, %s25, 1
        %p420 = scmp.lt.s32.totalorder %s26, 0
        %s421 = scalar_select %p420, %s26, 0
        %s422 = sadd.s32 %s421, %s419
        %s423 = smul.addr %s422, 4
        %s424 = scalar_lea.vmem %s1, %s423
      $region32: #{conv_block_forward.1} parent=23 // pred_fallthru
        _
      // Predicated region
      $region33: #{conv_block_forward.1} parent=23 // pred_check
        %p425 = pneg %p108
      $region34: #{conv_block_forward.1} parent=23 // pred_check_branch
        %427 = sbr.rel (%p425) target = $region36
      $region35: #{conv_block_forward.1} parent=23 // pred_region
        %p428 = scmp.lt.s32.totalorder %s25, 1
        %s429 = scalar_select %p428, %s25, 1
        %p430 = scmp.lt.s32.totalorder %s26, 0
        %s431 = scalar_select %p430, %s26, 0
        %s432 = sadd.s32 %s431, %s429
        %s433 = smul.addr %s432, 4
        %s434 = scalar_lea.vmem %s2, %s433
      $region36: #{conv_block_forward.1} parent=23 // pred_fallthru
        _
      // Predicated region
      $region37: #{conv_block_forward.1} parent=23 // pred_check
        %p435 = pneg %p136
      $region38: #{conv_block_forward.1} parent=23 // pred_check_branch
        %437 = sbr.rel (%p435) target = $region40
      $region39: #{conv_block_forward.1} parent=23 // pred_region
        %p438 = scmp.lt.s32.totalorder %s25, 1
        %s439 = scalar_select %p438, %s25, 1
        %p440 = scmp.lt.s32.totalorder %s26, 0
        %s441 = scalar_select %p440, %s26, 0
        %s442 = sadd.s32 %s441, %s439
        %s443 = smul.addr %s442, 4
        %s444 = scalar_lea.vmem %s3, %s443
      $region40: #{conv_block_forward.1} parent=23 // pred_fallthru
        _
      // Predicated region
      $region41: #{conv_block_forward.1} parent=23 // pred_check
        %p445 = pneg %p164
      $region42: #{conv_block_forward.1} parent=23 // pred_check_branch
        %447 = sbr.rel (%p445) target = $region44
      $region43: #{conv_block_forward.1} parent=23 // pred_region
        %p448 = scmp.lt.s32.totalorder %s25, 1
        %s449 = scalar_select %p448, %s25, 1
        %p450 = scmp.lt.s32.totalorder %s26, 0
        %s451 = scalar_select %p450, %s26, 0
        %s452 = sadd.s32 %s451, %s449
        %s453 = smul.addr %s452, 4
        %s454 = scalar_lea.vmem %s4, %s453
      $region44: #{conv_block_forward.1} parent=23 // pred_fallthru
        _
      // Predicated region
      $region45: #{conv_block_forward.1} parent=23 // pred_check
        %p455 = pneg %p192
      $region46: #{conv_block_forward.1} parent=23 // pred_check_branch
        %457 = sbr.rel (%p455) target = $region48
      $region47: #{conv_block_forward.1} parent=23 // pred_region
        %p458 = scmp.lt.s32.totalorder %s25, 1
        %s459 = scalar_select %p458, %s25, 1
        %p460 = scmp.lt.s32.totalorder %s26, 0
        %s461 = scalar_select %p460, %s26, 0
        %s462 = sadd.s32 %s461, %s459
        %s463 = smul.addr %s462, 4
        %s464 = scalar_lea.vmem %s5, %s463
      $region48: #{conv_block_forward.1} parent=23 // pred_fallthru
        _
      // Predicated region
      $region49: #{conv_block_forward.1} parent=23 // pred_check
        %p465 = pneg %p220
      $region50: #{conv_block_forward.1} parent=23 // pred_check_branch
        %467 = sbr.rel (%p465) target = $region52
      $region51: #{conv_block_forward.1} parent=23 // pred_region
        %p468 = scmp.lt.s32.totalorder %s25, 1
        %s469 = scalar_select %p468, %s25, 1
        %p470 = scmp.lt.s32.totalorder %s26, 0
        %s471 = scalar_select %p470, %s26, 0
        %s472 = sadd.s32 %s471, %s469
        %s473 = smul.addr %s472, 4
        %s474 = scalar_lea.vmem %s6, %s473
      $region52: #{conv_block_forward.1} parent=23 // pred_fallthru
        _
      // Predicated region
      $region53: #{conv_block_forward.1} parent=23 // pred_check
        %p475 = pneg %p248
      $region54: #{conv_block_forward.1} parent=23 // pred_check_branch
        %477 = sbr.rel (%p475) target = $region56
      $region55: #{conv_block_forward.1} parent=23 // pred_region
        %p478 = scmp.lt.s32.totalorder %s25, 1
        %s479 = scalar_select %p478, %s25, 1
        %p480 = scmp.lt.s32.totalorder %s26, 0
        %s481 = scalar_select %p480, %s26, 0
        %s482 = sadd.s32 %s481, %s479
        %s483 = smul.addr %s482, 4
        %s484 = scalar_lea.vmem %s7, %s483
      $region56: #{conv_block_forward.1} parent=23 // pred_fallthru
        _
      // Predicated region
      $region57: #{conv_block_forward.1} parent=23 // pred_check
        %p485 = pneg %p276
      $region58: #{conv_block_forward.1} parent=23 // pred_check_branch
        %487 = sbr.rel (%p485) target = $region60
      $region59: #{conv_block_forward.1} parent=23 // pred_region
        %p488 = scmp.lt.s32.totalorder %s25, 1
        %s489 = scalar_select %p488, %s25, 1
        %p490 = scmp.lt.s32.totalorder %s26, 0
        %s491 = scalar_select %p490, %s26, 0
        %s492 = sadd.s32 %s491, %s489
        %s493 = smul.addr %s492, 4
        %s494 = scalar_lea.vmem %s8, %s493
      $region60: #{conv_block_forward.1} parent=23 // pred_fallthru
        _
      // Predicated region
      $region61: #{conv_block_forward.1} parent=23 // pred_check
        %p495 = pneg %p304
      $region62: #{conv_block_forward.1} parent=23 // pred_check_branch
        %497 = sbr.rel (%p495) target = $region64
      $region63: #{conv_block_forward.1} parent=23 // pred_region
        %p498 = scmp.lt.s32.totalorder %s25, 1
        %s499 = scalar_select %p498, %s25, 1
        %p500 = scmp.lt.s32.totalorder %s26, 0
        %s501 = scalar_select %p500, %s26, 0
        %s502 = sadd.s32 %s501, %s499
        %s503 = smul.addr %s502, 4
        %s504 = scalar_lea.vmem %s9, %s503
      $region64: #{conv_block_forward.1} parent=23 // pred_fallthru
        _
    $region24: #{conv_block_forward.1} parent=5 // pred_fallthru
      _
    %p505 = scmp.le.s32.totalorder 1, %s18
    %p506 = scmp.lt.s32.totalorder %s18, 3
    %p507 = pnand %p505, %p506
    %p508 = pneg %p507
    // Predicated region
    $region65: #{conv_block_forward.1} parent=5 // pred_check
      _
    $region66: #{conv_block_forward.1} parent=5 // pred_check_branch
      %510 = sbr.rel (%p507) target = $region68
    $region67: #{conv_block_forward.1} parent=5 // pred_region
      %s511 = ssub.s32 %s18, 1
      %p512 = scmp.lt.s32.totalorder %s27, 1
      %s513 = scalar_select %p512, %s27, 1
      %p514 = scmp.lt.s32.totalorder %s28, 0
      %s515 = scalar_select %p514, %s28, 0
      %s516 = sadd.s32 %s515, %s513
      %s517 = smul.addr %s516, 4
      %s518 = scalar_lea.vmem %s0, %s517
      %p519 = pneg %p58
      %p520 = pneg %p55
      %p521 = scmp.lt.s32.totalorder %s27, 1
      %s522 = scalar_select %p521, %s27, 1
      %p523 = scmp.lt.s32.totalorder %s28, 0
      %s524 = scalar_select %p523, %s28, 0
      %s525 = sadd.s32 %s524, %s522
      %s526 = smul.addr %s525, 4
      %s527 = scalar_lea.vmem %s1, %s526
      %p528 = pneg %p86
      %p529 = pneg %p83
      %p530 = scmp.lt.s32.totalorder %s27, 1
      %s531 = scalar_select %p530, %s27, 1
      %p532 = scmp.lt.s32.totalorder %s28, 0
      %s533 = scalar_select %p532, %s28, 0
      %s534 = sadd.s32 %s533, %s531
      %s535 = smul.addr %s534, 4
      %s536 = scalar_lea.vmem %s2, %s535
      %p537 = pneg %p114
      %p538 = pneg %p111
      %p539 = scmp.lt.s32.totalorder %s27, 1
      %s540 = scalar_select %p539, %s27, 1
      %p541 = scmp.lt.s32.totalorder %s28, 0
      %s542 = scalar_select %p541, %s28, 0
      %s543 = sadd.s32 %s542, %s540
      %s544 = smul.addr %s543, 4
      %s545 = scalar_lea.vmem %s3, %s544
      %p546 = pneg %p142
      %p547 = pneg %p139
      %p548 = scmp.lt.s32.totalorder %s27, 1
      %s549 = scalar_select %p548, %s27, 1
      %p550 = scmp.lt.s32.totalorder %s28, 0
      %s551 = scalar_select %p550, %s28, 0
      %s552 = sadd.s32 %s551, %s549
      %s553 = smul.addr %s552, 4
      %s554 = scalar_lea.vmem %s4, %s553
      %p555 = pneg %p170
      %p556 = pneg %p167
      %p557 = scmp.lt.s32.totalorder %s27, 1
      %s558 = scalar_select %p557, %s27, 1
      %p559 = scmp.lt.s32.totalorder %s28, 0
      %s560 = scalar_select %p559, %s28, 0
      %s561 = sadd.s32 %s560, %s558
      %s562 = smul.addr %s561, 4
      %s563 = scalar_lea.vmem %s5, %s562
      %p564 = pneg %p198
      %p565 = pneg %p195
      %p566 = scmp.lt.s32.totalorder %s27, 1
      %s567 = scalar_select %p566, %s27, 1
      %p568 = scmp.lt.s32.totalorder %s28, 0
      %s569 = scalar_select %p568, %s28, 0
      %s570 = sadd.s32 %s569, %s567
      %s571 = smul.addr %s570, 4
      %s572 = scalar_lea.vmem %s6, %s571
      %p573 = pneg %p226
      %p574 = pneg %p223
      %p575 = scmp.lt.s32.totalorder %s27, 1
      %s576 = scalar_select %p575, %s27, 1
      %p577 = scmp.lt.s32.totalorder %s28, 0
      %s578 = scalar_select %p577, %s28, 0
      %s579 = sadd.s32 %s578, %s576
      %s580 = smul.addr %s579, 4
      %s581 = scalar_lea.vmem %s7, %s580
      %p582 = pneg %p254
      %p583 = pneg %p251
      %p584 = scmp.lt.s32.totalorder %s27, 1
      %s585 = scalar_select %p584, %s27, 1
      %p586 = scmp.lt.s32.totalorder %s28, 0
      %s587 = scalar_select %p586, %s28, 0
      %s588 = sadd.s32 %s587, %s585
      %s589 = smul.addr %s588, 4
      %s590 = scalar_lea.vmem %s8, %s589
      %p591 = pneg %p282
      %p592 = pneg %p279
      %p593 = scmp.lt.s32.totalorder %s27, 1
      %s594 = scalar_select %p593, %s27, 1
      %p595 = scmp.lt.s32.totalorder %s28, 0
      %s596 = scalar_select %p595, %s28, 0
      %s597 = sadd.s32 %s596, %s594
      %s598 = smul.addr %s597, 4
      %s599 = scalar_lea.vmem %s9, %s598
      %p600 = pneg %p310
      %p601 = pneg %p307
      %p602 = pneg %p331
      %p603 = pneg %p328
      %p604 = pneg %p352
      %p605 = pneg %p349
      %p606 = pneg %p380
      %p607 = pneg %p377
      %p608 = scmp.lt.s32.totalorder %s27, 1
      %s609 = scalar_select %p608, %s27, 1
      %p610 = scmp.lt.s32.totalorder %s28, 0
      %s611 = scalar_select %p610, %s28, 0
      %s612 = sadd.s32 %s611, %s609
      %s613 = smul.addr %s612, 8
      %s614 = scalar_lea.vmem %s12, %s613
      %p615 = scmp.lt.s32.totalorder %s27, 1
      %s616 = scalar_select %p615, %s27, 1
      %p617 = scmp.lt.s32.totalorder %s28, 0
      %s618 = scalar_select %p617, %s28, 0
      %s619 = sadd.s32 %s618, %s616
      %s620 = smul.addr %s619, 4
      %s621 = scalar_lea.vmem %s0, %s620
      %p622 = scmp.lt.s32.totalorder %s27, 1
      %s623 = scalar_select %p622, %s27, 1
      %p624 = scmp.lt.s32.totalorder %s28, 0
      %s625 = scalar_select %p624, %s28, 0
      %s626 = sadd.s32 %s625, %s623
      %s627 = smul.addr %s626, 4
      %s628 = scalar_lea.vmem %s1, %s627
      %p629 = scmp.lt.s32.totalorder %s27, 1
      %s630 = scalar_select %p629, %s27, 1
      %p631 = scmp.lt.s32.totalorder %s28, 0
      %s632 = scalar_select %p631, %s28, 0
      %s633 = sadd.s32 %s632, %s630
      %s634 = smul.addr %s633, 4
      %s635 = scalar_lea.vmem %s2, %s634
      %p636 = scmp.lt.s32.totalorder %s27, 1
      %s637 = scalar_select %p636, %s27, 1
      %p638 = scmp.lt.s32.totalorder %s28, 0
      %s639 = scalar_select %p638, %s28, 0
      %s640 = sadd.s32 %s639, %s637
      %s641 = smul.addr %s640, 4
      %s642 = scalar_lea.vmem %s3, %s641
      %p643 = scmp.lt.s32.totalorder %s27, 1
      %s644 = scalar_select %p643, %s27, 1
      %p645 = scmp.lt.s32.totalorder %s28, 0
      %s646 = scalar_select %p645, %s28, 0
      %s647 = sadd.s32 %s646, %s644
      %s648 = smul.addr %s647, 4
      %s649 = scalar_lea.vmem %s4, %s648
      %p650 = scmp.lt.s32.totalorder %s27, 1
      %s651 = scalar_select %p650, %s27, 1
      %p652 = scmp.lt.s32.totalorder %s28, 0
      %s653 = scalar_select %p652, %s28, 0
      %s654 = sadd.s32 %s653, %s651
      %s655 = smul.addr %s654, 4
      %s656 = scalar_lea.vmem %s5, %s655
      %p657 = scmp.lt.s32.totalorder %s27, 1
      %s658 = scalar_select %p657, %s27, 1
      %p659 = scmp.lt.s32.totalorder %s28, 0
      %s660 = scalar_select %p659, %s28, 0
      %s661 = sadd.s32 %s660, %s658
      %s662 = smul.addr %s661, 4
      %s663 = scalar_lea.vmem %s6, %s662
      %p664 = scmp.lt.s32.totalorder %s27, 1
      %s665 = scalar_select %p664, %s27, 1
      %p666 = scmp.lt.s32.totalorder %s28, 0
      %s667 = scalar_select %p666, %s28, 0
      %s668 = sadd.s32 %s667, %s665
      %s669 = smul.addr %s668, 4
      %s670 = scalar_lea.vmem %s7, %s669
      %p671 = scmp.lt.s32.totalorder %s27, 1
      %s672 = scalar_select %p671, %s27, 1
      %p673 = scmp.lt.s32.totalorder %s28, 0
      %s674 = scalar_select %p673, %s28, 0
      %s675 = sadd.s32 %s674, %s672
      %s676 = smul.addr %s675, 4
      %s677 = scalar_lea.vmem %s8, %s676
      %p678 = scmp.lt.s32.totalorder %s27, 1
      %s679 = scalar_select %p678, %s27, 1
      %p680 = scmp.lt.s32.totalorder %s28, 0
      %s681 = scalar_select %p680, %s28, 0
      %s682 = sadd.s32 %s681, %s679
      %s683 = smul.addr %s682, 4
      %s684 = scalar_lea.vmem %s9, %s683
      %p685 = scmp.lt.s32.totalorder %s27, 1
      %s686 = scalar_select %p685, %s27, 1
      %p687 = scmp.lt.s32.totalorder %s28, 0
      %s688 = scalar_select %p687, %s28, 0
      %s689 = sadd.s32 %s688, %s686
      %s690 = smul.addr %s689, 8
      %s691 = scalar_lea.vmem %s12, %s690
      %v693 = vld [vmem:[%s621] sm:$0xf]
      %vm694 = vcmask 519168
      %695 = vst.msk [vmem:[#allocation2] sm:$0xf] %vm694, %v693
      %v696 = vld [vmem:[%s628] sm:$0xf]
      %697 = vst.msk [vmem:[#allocation2 + $0x4] sm:$0xf] %vm694, %v696
      %v698 = vld [vmem:[%s635] sm:$0xf]
      %699 = vst.msk [vmem:[#allocation2 + $0x8] sm:$0xf] %vm694, %v698
      %v700 = vld [vmem:[%s642] sm:$0xf]
      %701 = vst.msk [vmem:[#allocation2 + $0xc] sm:$0xf] %vm694, %v700
      %v702 = vld [vmem:[%s649] sm:$0xf]
      %703 = vst.msk [vmem:[#allocation2 + $0x10] sm:$0xf] %vm694, %v702
      %v704 = vld [vmem:[%s656] sm:$0xf]
      %705 = vst.msk [vmem:[#allocation2 + $0x14] sm:$0xf] %vm694, %v704
      %v706 = vld [vmem:[%s663] sm:$0xf]
      %707 = vst.msk [vmem:[#allocation2 + $0x18] sm:$0xf] %vm694, %v706
      %v708 = vld [vmem:[%s670] sm:$0xf]
      %709 = vst.msk [vmem:[#allocation2 + $0x1c] sm:$0xf] %vm694, %v708
      %v710 = vld [vmem:[%s677] sm:$0xf]
      %711 = vst.msk [vmem:[#allocation2 + $0x20] sm:$0xf] %vm694, %v710
      %v712 = vld [vmem:[%s684] sm:$0xf]
      %713 = vst.msk [vmem:[#allocation2 + $0x24] sm:$0xf] %vm694, %v712
      %v714 = vld [vmem:[%s621] sm:$0xf]
      %716 = vrot.lane.b32.xlu0 %v714, 120
      %v717 = vpop.permute.xlu0 %716
      %719 = vst.msk [vmem:[#allocation2 + $0x28] sm:$0xf] %vm694, %v717
      %v720 = vld [vmem:[%s628] sm:$0xf]
      %722 = vrot.lane.b32.xlu0 %v720, 120
      %v723 = vpop.permute.xlu0 %722
      %725 = vst.msk [vmem:[#allocation2 + $0x2c] sm:$0xf] %vm694, %v723
      %v726 = vld [vmem:[%s635] sm:$0xf]
      %728 = vrot.lane.b32.xlu0 %v726, 120
      %v729 = vpop.permute.xlu0 %728
      %731 = vst.msk [vmem:[#allocation2 + $0x30] sm:$0xf] %vm694, %v729
      %v732 = vld [vmem:[%s642] sm:$0xf]
      %734 = vrot.lane.b32.xlu0 %v732, 120
      %v735 = vpop.permute.xlu0 %734
      %737 = vst.msk [vmem:[#allocation2 + $0x34] sm:$0xf] %vm694, %v735
      %v738 = vld [vmem:[%s649] sm:$0xf]
      %740 = vrot.lane.b32.xlu0 %v738, 120
      %v741 = vpop.permute.xlu0 %740
      %743 = vst.msk [vmem:[#allocation2 + $0x38] sm:$0xf] %vm694, %v741
      %v744 = vld [vmem:[%s656] sm:$0xf]
      %746 = vrot.lane.b32.xlu0 %v744, 120
      %v747 = vpop.permute.xlu0 %746
      %749 = vst.msk [vmem:[#allocation2 + $0x3c] sm:$0xf] %vm694, %v747
      %v750 = vld [vmem:[%s663] sm:$0xf]
      %752 = vrot.lane.b32.xlu0 %v750, 120
      %v753 = vpop.permute.xlu0 %752
      %755 = vst.msk [vmem:[#allocation2 + $0x40] sm:$0xf] %vm694, %v753
      %v756 = vld [vmem:[%s670] sm:$0xf]
      %758 = vrot.lane.b32.xlu0 %v756, 120
      %v759 = vpop.permute.xlu0 %758
      %761 = vst.msk [vmem:[#allocation2 + $0x44] sm:$0xf] %vm694, %v759
      %v762 = vld [vmem:[%s677] sm:$0xf]
      %764 = vrot.lane.b32.xlu0 %v762, 120
      %v765 = vpop.permute.xlu0 %764
      %767 = vst.msk [vmem:[#allocation2 + $0x48] sm:$0xf] %vm694, %v765
      %v768 = vld [vmem:[%s684] sm:$0xf]
      %770 = vrot.lane.b32.xlu0 %v768, 120
      %v771 = vpop.permute.xlu0 %770
      %773 = vst.msk [vmem:[#allocation2 + $0x4c] sm:$0xf] %vm694, %v771
      %v774 = vld [vmem:[%s621] sm:$0xf]
      %776 = vrot.lane.b32.xlu0 %v774, 112
      %v777 = vpop.permute.xlu0 %776
      %779 = vst.msk [vmem:[#allocation2 + $0x50] sm:$0xf] %vm694, %v777
      %v780 = vld [vmem:[%s628] sm:$0xf]
      %782 = vrot.lane.b32.xlu0 %v780, 112
      %v783 = vpop.permute.xlu0 %782
      %785 = vst.msk [vmem:[#allocation2 + $0x54] sm:$0xf] %vm694, %v783
      %v786 = vld [vmem:[%s635] sm:$0xf]
      %788 = vrot.lane.b32.xlu0 %v786, 112
      %v789 = vpop.permute.xlu0 %788
      %791 = vst.msk [vmem:[#allocation2 + $0x58] sm:$0xf] %vm694, %v789
      %v792 = vld [vmem:[%s642] sm:$0xf]
      %794 = vrot.lane.b32.xlu0 %v792, 112
      %v795 = vpop.permute.xlu0 %794
      %797 = vst.msk [vmem:[#allocation2 + $0x5c] sm:$0xf] %vm694, %v795
      %v798 = vld [vmem:[%s649] sm:$0xf]
      %800 = vrot.lane.b32.xlu0 %v798, 112
      %v801 = vpop.permute.xlu0 %800
      %803 = vst.msk [vmem:[#allocation2 + $0x60] sm:$0xf] %vm694, %v801
      %v804 = vld [vmem:[%s10] sm:$0xff]
      %v805 = vld [vmem:[#allocation2] sm:$0xf]
      %v806 = vld [vmem:[#allocation2 + $0x4] sm:$0xf]
      %v807 = vld [vmem:[#allocation2 + $0x8] sm:$0xf]
      %v808 = vld [vmem:[#allocation2 + $0xc] sm:$0xf]
      %v809 = vld [vmem:[#allocation2 + $0x10] sm:$0xf]
      %v810 = vld [vmem:[#allocation2 + $0x14] sm:$0xf]
      %v811 = vld [vmem:[#allocation2 + $0x18] sm:$0xf]
      %v812 = vld [vmem:[#allocation2 + $0x1c] sm:$0xf]
      %v813 = vld [vmem:[#allocation2 + $0x20] sm:$0xf]
      %v814 = vld [vmem:[#allocation2 + $0x24] sm:$0xf]
      %v815 = vld [vmem:[#allocation2 + $0x28] sm:$0xf]
      %v816 = vld [vmem:[#allocation2 + $0x2c] sm:$0xf]
      %v817 = vld [vmem:[#allocation2 + $0x30] sm:$0xf]
      %v818 = vld [vmem:[#allocation2 + $0x34] sm:$0xf]
      %v819 = vld [vmem:[#allocation2 + $0x38] sm:$0xf]
      %v820 = vld [vmem:[#allocation2 + $0x3c] sm:$0xf]
      %v821 = vld [vmem:[#allocation2 + $0x40] sm:$0xf]
      %v822 = vld [vmem:[#allocation2 + $0x44] sm:$0xf]
      %v823 = vld [vmem:[#allocation2 + $0x48] sm:$0xf]
      %v824 = vld [vmem:[#allocation2 + $0x4c] sm:$0xf]
      %v825 = vld [vmem:[#allocation2 + $0x50] sm:$0xf]
      %v826 = vld [vmem:[#allocation2 + $0x54] sm:$0xf]
      %v827 = vld [vmem:[#allocation2 + $0x58] sm:$0xf]
      %v828 = vld [vmem:[#allocation2 + $0x5c] sm:$0xf]
      %v829 = vld [vmem:[#allocation2 + $0x60] sm:$0xf]
      %v830 = vld [vmem:[%s11] sm:$0xff]
      %832 = vset.pattern.permute.xlu0 0
      %833 = vperm.xlu0 %832, %v830
      %v834 = vpop.permute.xlu0 %833
      %v837 = vunpack.c.l.b16 %v804
      %v838 = vunpack.c.h.b16 %v804
      %v839 = vpack.c.b16 %v837, %v837
      %v840 = vpack.c.b16 %v838, %v838
      %v867 = vunpack.c.l.b16 %v805
      %v868 = vunpack.c.l.b16 %v806
      %v869 = vunpack.c.l.b16 %v807
      %v870 = vunpack.c.l.b16 %v808
      %v871 = vunpack.c.l.b16 %v809
      %v872 = vunpack.c.l.b16 %v810
      %v873 = vunpack.c.l.b16 %v811
      %v874 = vunpack.c.l.b16 %v812
      %v875 = vunpack.c.l.b16 %v813
      %v876 = vunpack.c.l.b16 %v814
      %v877 = vunpack.c.l.b16 %v815
      %v878 = vunpack.c.l.b16 %v816
      %v879 = vunpack.c.l.b16 %v817
      %v880 = vunpack.c.l.b16 %v818
      %v881 = vunpack.c.l.b16 %v819
      %v882 = vunpack.c.l.b16 %v820
      %v883 = vunpack.c.l.b16 %v821
      %v884 = vunpack.c.l.b16 %v822
      %v885 = vunpack.c.l.b16 %v823
      %v886 = vunpack.c.l.b16 %v824
      %v887 = vunpack.c.l.b16 %v825
      %v888 = vunpack.c.l.b16 %v826
      %v889 = vunpack.c.l.b16 %v827
      %v890 = vunpack.c.l.b16 %v828
      %v891 = vunpack.c.l.b16 %v829
      %v892 = vpack.c.b16 %v868, %v867
      %v893 = vpack.c.b16 %v870, %v869
      %v894 = vpack.c.b16 %v872, %v871
      %v895 = vpack.c.b16 %v874, %v873
      %v896 = vpack.c.b16 %v876, %v875
      %v897 = vpack.c.b16 %v878, %v877
      %v898 = vpack.c.b16 %v880, %v879
      %v899 = vpack.c.b16 %v882, %v881
      %v900 = vpack.c.b16 %v884, %v883
      %v901 = vpack.c.b16 %v886, %v885
      %v902 = vpack.c.b16 %v888, %v887
      %v903 = vpack.c.b16 %v890, %v889
      %v904 = vpack.c.b16 %v891, %v891
      %vm917 = vcmask 588800
      %v919 = vsel %vm917, %v840, 0
      %vm921 = vcmask 1043456
      %v923 = vsel %vm921, %v904, 0
      %925 = vmatprep.subr.bf16.mxu0 0
      %926 = vmatpush1.bf16.msra.mxu0 %v899
      %927 = vmatprep.subr.bf16.mxu0 0
      %928 = vmatpush1.bf16.msra.mxu0 %v898
      %929 = vmatprep.subr.bf16.mxu0 0
      %930 = vmatpush1.bf16.msra.mxu0 %v897
      %931 = vmatprep.subr.bf16.mxu0 0
      %932 = vmatpush1.bf16.msra.mxu0 %v896
      %933 = vmatprep.subr.bf16.mxu0 0
      %934 = vmatpush1.bf16.msra.mxu0 %v895
      %935 = vmatprep.subr.bf16.mxu0 0
      %936 = vmatpush1.bf16.msra.mxu0 %v894
      %937 = vmatprep.subr.bf16.mxu0 0
      %938 = vmatpush1.bf16.msra.mxu0 %v893
      %939 = vmatprep.subr.bf16.mxu0 0
      %940 = vmatpush1.bf16.msra.mxu0 %v892
      %941 = vmatprep.subr.bf16.mxu0 0
      %942 = vmatpush2.bf16.msra.mxu0 0
      %943 = vmatprep.subr.bf16.mxu0 0
      %944 = vmatpush2.bf16.msra.mxu0 0
      %945 = vmatprep.subr.bf16.mxu0 0
      %946 = vmatpush2.bf16.msra.mxu0 0
      %947 = vmatprep.subr.bf16.mxu0 0
      %948 = vmatpush2.bf16.msra.mxu0 %v923
      %949 = vmatprep.subr.bf16.mxu0 0
      %950 = vmatpush2.bf16.msra.mxu0 %v903
      %951 = vmatprep.subr.bf16.mxu0 0
      %952 = vmatpush2.bf16.msra.mxu0 %v902
      %953 = vmatprep.subr.bf16.mxu0 0
      %954 = vmatpush2.bf16.msra.mxu0 %v901
      %955 = vmatprep.subr.bf16.mxu0 0
      %956 = vmatpush2.bf16.msra.mxu0 %v900
      %957 = vmatprep.mubr.bf16.mxu0 %v919
      %958 = vmatmul.mubr.bf16.gmra.mxu0 %v839
      %v959 = vpop.f32.mrf.mxu0
      %v960 = vadd.f32 %v834, %v959
      %v961 = vpop.f32.mrf.mxu0
      %v962 = vpop.f32.mrf.mxu0
      %v963 = vpop.f32.mrf.mxu0
      %964 = vdwg.mxu0
      %vm965 = vcmp.gt.f32.partialorder %v960, 0.0
      %v966 = vmul.f32 %v960, 0.1
      %v967 = vsel %vm965, %v960, %v966
      %vm968 = vcmask 523264
      %969 = vst.msk [vmem:[%s691] sm:$0xff] %vm968, %v967
      %p970 = scmp.lt.s32.totalorder %s27, 1
      %s971 = scalar_select %p970, %s27, 1
      %p972 = scmp.lt.s32.totalorder %s28, 0
      %s973 = scalar_select %p972, %s28, 0
      %s974 = sadd.s32 %s973, %s971
      %s975 = smul.addr %s974, 8
      %s976 = scalar_lea.vmem %s12, %s975
      // Predicated region
      $region69: #{conv_block_forward.1} parent=67 // pred_check
        %p977 = pneg %p377
      $region70: #{conv_block_forward.1} parent=67 // pred_check_branch
        %979 = sbr.rel (%p977) target = $region72
      $region71: #{conv_block_forward.1} parent=67 // pred_region
        _
      $region72: #{conv_block_forward.1} parent=67 // pred_fallthru
        _
    $region68: #{conv_block_forward.1} parent=5 // pred_fallthru
      _
    %p980 = scmp.le.s32.totalorder 2, %s18
    // Predicated region
    $region73: #{conv_block_forward.1} parent=5 // pred_check
      %p981 = pneg %p980
    $region74: #{conv_block_forward.1} parent=5 // pred_check_branch
      %983 = sbr.rel (%p981) target = $region76
    $region75: #{conv_block_forward.1} parent=5 // pred_region
      %s984 = ssub.s32 %s18, 2
      // Predicated region
      $region77: #{conv_block_forward.1} parent=75 // pred_check
        %p985 = pneg %p383
      $region78: #{conv_block_forward.1} parent=75 // pred_check_branch
        %987 = sbr.rel (%p985) target = $region80
      $region79: #{conv_block_forward.1} parent=75 // pred_region
        %p988 = scmp.lt.s32.totalorder %s29, 1
        %s989 = scalar_select %p988, %s29, 1
        %p990 = scmp.lt.s32.totalorder %s30, 0
        %s991 = scalar_select %p990, %s30, 0
        %s992 = sadd.s32 %s991, %s989
        %s993 = smul.addr %s992, 8
        %s994 = scalar_lea.vmem %s12, %s993
      $region80: #{conv_block_forward.1} parent=75 // pred_fallthru
        _
    $region76: #{conv_block_forward.1} parent=5 // pred_fallthru
      _
  $region6: #{conv_block_forward.1} parent=0 // loop_footer
    %s22 = sadd.s32 1, %s18
  $region7: #{conv_block_forward.1} parent=0 // loop_footer_branch
    %17 = sbr.rel target = $region3
  $region8: #{conv_block_forward.1} parent=0 // loop_exit
    _

</llo_original>
